<compile_context>
chip_gen: v5e
topology: v5e:2x2
jax: 0.10.0
libtpu: 0.0.40
codegen_flags: <defaults>
</compile_context>

<pallas_src>
import jax
import jax.numpy as jnp
from jax.experimental import pallas as pl
from jax.experimental.pallas import tpu as pltpu

HIDDEN = 128
LANE = 128
SUBLANE = 8


def _round_up(x, m):
    return (x + m - 1) // m * m


def actor_kernel(x_ref, w1_ref, b1_ref, w2_ref, b2_ref, w3_ref, b3_ref, out_ref):
    dt = w1_ref.dtype
    # In-kernel cast of the activations (cheap VPU pack hidden under the DMA;
    # avoids a separate wrapper-side astype pass over x in HBM).
    x = x_ref[...].astype(dt)

    # Layer 1: Linear + ReLU (MXU matmul, f32 accumulate; bias kept f32).
    h = jnp.dot(x, w1_ref[...], preferred_element_type=jnp.float32)
    h = jnp.maximum(h + b1_ref[...], 0.0)

    # Layer 2: Linear + ReLU.
    h = jnp.dot(h.astype(dt), w2_ref[...], preferred_element_type=jnp.float32)
    h = jnp.maximum(h + b2_ref[...], 0.0)

    # Layer 3: Linear (output padded to 128 cols -> full (tile_b, 128) tile).
    h = jnp.dot(h.astype(dt), w3_ref[...], preferred_element_type=jnp.float32)
    h = h + b3_ref[...]

    # Transpose on the XLU (otherwise idle), keep only the real action rows,
    # then tanh on the narrow (action_pad8, tile_b) slab -> 16x fewer output
    # bytes than storing the 128-wide slab, and stores stay lane-dense.
    ht = jnp.transpose(h)                      # (n_pad, tile_b)
    a_rows = out_ref.shape[0]                  # round_up(action_dim, 8), static
    out_ref[...] = jnp.tanh(ht[:a_rows, :]).astype(out_ref.dtype)


def init_actor_params(key, state_dim, action_dim, hidden=HIDDEN):
    """PyTorch nn.Linear-style init: uniform(-1/sqrt(fan_in), 1/sqrt(fan_in)).
    Weights stored as (in, out)."""
    def linear(k, fan_in, fan_out):
        kw, kb = jax.random.split(k)
        bound = 1.0 / jnp.sqrt(jnp.float32(fan_in))
        w = jax.random.uniform(kw, (fan_in, fan_out), jnp.float32, -bound, bound)
        b = jax.random.uniform(kb, (1, fan_out), jnp.float32, -bound, bound)
        return w, b

    k1, k2, k3 = jax.random.split(key, 3)
    w1, b1 = linear(k1, state_dim, hidden)
    w2, b2 = linear(k2, hidden, hidden)
    w3, b3 = linear(k3, hidden, action_dim)
    return {"w1": w1, "b1": b1, "w2": w2, "b2": b2, "w3": w3, "b3": b3}


def prepare_actor_params(params, *, compute_dtype=jnp.bfloat16):
    """One-time (load-time) prep of matmul operands.

    bf16 operands are the recommended default on v5e/v6e/v7x (all MXUs take
    bf16 natively; f32 operands force multi-pass matmuls).  Biases stay f32
    (added post-accumulation).  Only layer-3's output dim is zero-padded to a
    multiple of 128 so the in-kernel transpose operand is a full tile; the
    state feature dim is NOT padded (it is DMA'd at its true width).
    """
    # NOTE: an optional fp8 operand path for v7x inference could further halve
    # activation bytes; keep f32 accumulation if adding it.
    state_dim = params["w1"].shape[0]
    action_dim = params["w3"].shape[1]
    n_pad = _round_up(max(action_dim, LANE), LANE)

    w1 = params["w1"].astype(compute_dtype)
    w2 = params["w2"].astype(compute_dtype)
    w3 = jnp.pad(params["w3"], ((0, 0), (0, n_pad - action_dim))).astype(compute_dtype)
    b1 = params["b1"].astype(jnp.float32)
    b2 = params["b2"].astype(jnp.float32)
    b3 = jnp.pad(params["b3"], ((0, 0), (0, n_pad - action_dim))).astype(jnp.float32)
    return {"w1": w1, "b1": b1, "w2": w2, "b2": b2, "w3": w3, "b3": b3,
            "action_dim": action_dim, "state_dim": state_dim}


def actor_forward(x, prepared, *, tile_b=4096):
    """x: (B, state_dim) float32. prepared: output of prepare_actor_params."""
    w1, b1 = prepared["w1"], prepared["b1"]
    w2, b2 = prepared["w2"], prepared["b2"]
    w3, b3 = prepared["w3"], prepared["b3"]
    action_dim = prepared["action_dim"]

    B, state_dim = x.shape
    assert state_dim == w1.shape[0], "state_dim mismatch with prepared params"
    n_pad = w3.shape[1]
    a_pad = _round_up(action_dim, SUBLANE)

    # Batch tile: a multiple of 128 (it is the lane dim of the output block
    # and the transpose operand), capped so the grid keeps >= 2 steps when the
    # batch is big enough (v7x has two TensorCores; "parallel" shards the grid).
    tile_b = max(LANE, _round_up(min(tile_b, max(B, 1)), LANE))
    half = _round_up(pl.cdiv(B, 2), LANE)
    tile_b = min(tile_b, max(half, LANE))
    grid = (pl.cdiv(B, tile_b),)

    flops = 2 * B * (state_dim * HIDDEN + HIDDEN * HIDDEN + HIDDEN * n_pad)
    bytes_accessed = (
        int(x.size) * x.dtype.itemsize
        + sum(int(a.size) * a.dtype.itemsize for a in (w1, b1, w2, b2, w3, b3))
        + a_pad * B * 4)
    cost = pl.CostEstimate(flops=int(flops),
                           transcendentals=int(a_pad * B),
                           bytes_accessed=int(bytes_accessed))

    out = pl.pallas_call(
        actor_kernel,
        out_shape=jax.ShapeDtypeStruct((a_pad, B), jnp.float32),
        grid=grid,
        in_specs=[
            # Activations: pipelined per batch tile, true (unpadded) width.
            pl.BlockSpec((tile_b, state_dim), lambda i: (i, 0)),
            # Weights / biases: same block every step -> resident in VMEM.
            pl.BlockSpec((state_dim, HIDDEN), lambda i: (0, 0)),
            pl.BlockSpec((1, HIDDEN), lambda i: (0, 0)),
            pl.BlockSpec((HIDDEN, HIDDEN), lambda i: (0, 0)),
            pl.BlockSpec((1, HIDDEN), lambda i: (0, 0)),
            pl.BlockSpec((HIDDEN, n_pad), lambda i: (0, 0)),
            pl.BlockSpec((1, n_pad), lambda i: (0, 0)),
        ],
        # Transposed narrow output: (action_pad8, B), lane dim = batch tile.
        out_specs=pl.BlockSpec((a_pad, tile_b), lambda i: (0, i)),
        compiler_params=pltpu.CompilerParams(
            dimension_semantics=("parallel",)),
        cost_estimate=cost,
    )(x, w1, b1, w2, b2, w3, b3)

    # (a_pad, B) -> (B, action_dim): tiny slice + transpose of a narrow array.
    return out[:action_dim, :].T


if __name__ == "__main__":
    key = jax.random.PRNGKey(0)
    k_params, k_state = jax.random.split(key)

    batch, state_dim, action_dim = 4, 16, 8
    params = init_actor_params(k_params, state_dim, action_dim)
    state = jax.random.normal(k_state, (batch, state_dim), jnp.float32)

    # Pure-JAX reference (unpadded f32 params, highest-precision matmuls).
    hp = jax.lax.Precision.HIGHEST
    ref = jnp.maximum(jnp.dot(state, params["w1"], precision=hp) + params["b1"], 0.0)
    ref = jnp.maximum(jnp.dot(ref, params["w2"], precision=hp) + params["b2"], 0.0)
    ref = jnp.tanh(jnp.dot(ref, params["w3"], precision=hp) + params["b3"])

    # f32-operand path (near-exact match expected).
    prepared_f32 = prepare_actor_params(params, compute_dtype=jnp.float32)
    out_f32 = actor_forward(state, prepared_f32)
    jax.block_until_ready(out_f32)
    assert out_f32.shape == (batch, action_dim)
    assert jnp.allclose(out_f32, ref, atol=1e-4, rtol=1e-4), "f32 mismatch vs reference"

    # bf16-operand path (recommended default on v5e/v6e/v7x; f32 accumulate,
    # bias add and tanh).  bf16 activations/weights -> ~1e-2 expected error.
    prepared_bf16 = prepare_actor_params(params)  # compute_dtype defaults to bf16
    out_bf16 = actor_forward(state, prepared_bf16)
    jax.block_until_ready(out_bf16)
    assert out_bf16.shape == (batch, action_dim)
    assert jnp.allclose(out_bf16, ref, atol=1e-1), "bf16 mismatch vs reference"

    print("KERNEL_OK")
</pallas_src>

<mosaic_0001>
module attributes {stable_mosaic.version = 11 : i64} {
  func.func @actor_kernel(%arg0: i32, %arg1: memref<128x16xf32, #tpu.memory_space<vmem>>, %arg2: memref<16x128xf32, #tpu.memory_space<vmem>>, %arg3: memref<1x128xf32, #tpu.memory_space<vmem>>, %arg4: memref<128x128xf32, #tpu.memory_space<vmem>>, %arg5: memref<1x128xf32, #tpu.memory_space<vmem>>, %arg6: memref<128x128xf32, #tpu.memory_space<vmem>>, %arg7: memref<1x128xf32, #tpu.memory_space<vmem>>, %arg8: memref<8x128xf32, #tpu.memory_space<vmem>>) attributes {dimension_semantics = [#tpu.dimension_semantics<parallel>], iteration_bounds = array<i64: 1>, scalar_prefetch = 0 : i64, scratch_operands = 0 : i64, tpu.core_type = #tpu.core_type<tc>, window_params = [{transform_indices = @transform_0, window_bounds = array<i64: 128, 16>}, {pipeline_mode = #tpu.pipeline_mode<synchronous>, transform_indices = @transform_1, window_bounds = array<i64: 16, 128>}, {pipeline_mode = #tpu.pipeline_mode<synchronous>, transform_indices = @transform_2, window_bounds = array<i64: 1, 128>}, {pipeline_mode = #tpu.pipeline_mode<synchronous>, transform_indices = @transform_3, window_bounds = array<i64: 128, 128>}, {pipeline_mode = #tpu.pipeline_mode<synchronous>, transform_indices = @transform_4, window_bounds = array<i64: 1, 128>}, {pipeline_mode = #tpu.pipeline_mode<synchronous>, transform_indices = @transform_5, window_bounds = array<i64: 128, 128>}, {pipeline_mode = #tpu.pipeline_mode<synchronous>, transform_indices = @transform_6, window_bounds = array<i64: 1, 128>}, {transform_indices = @transform_7, window_bounds = array<i64: 8, 128>}]} {
    %c0 = arith.constant 0 : index
    %c0_0 = arith.constant 0 : index
    %0 = vector.load %arg1[%c0, %c0_0] : memref<128x16xf32, #tpu.memory_space<vmem>>, vector<128x16xf32>
    %c0_1 = arith.constant 0 : index
    %c0_2 = arith.constant 0 : index
    %1 = vector.load %arg2[%c0_1, %c0_2] : memref<16x128xf32, #tpu.memory_space<vmem>>, vector<16x128xf32>
    %cst = arith.constant dense<0.000000e+00> : vector<128x128xf32>
    %2 = tpu.matmul %0, %1, %cst {dimension_numbers = #tpu.dot_dimension_numbers<[1], [0], [0], [1], [0, 0, 1, 1], [], []>} : vector<128x16xf32>, vector<16x128xf32>, vector<128x128xf32> -> vector<128x128xf32>
    %c0_3 = arith.constant 0 : index
    %c0_4 = arith.constant 0 : index
    %3 = vector.load %arg3[%c0_3, %c0_4] : memref<1x128xf32, #tpu.memory_space<vmem>>, vector<1x128xf32>
    %4 = vector.broadcast %3 : vector<1x128xf32> to vector<128x128xf32>
    %5 = arith.addf %2, %4 : vector<128x128xf32>
    %cst_5 = arith.constant 0.000000e+00 : f32
    %6 = vector.broadcast %cst_5 : f32 to vector<128x128xf32>
    %7 = arith.maximumf %5, %6 : vector<128x128xf32>
    %c0_6 = arith.constant 0 : index
    %c0_7 = arith.constant 0 : index
    %8 = vector.load %arg4[%c0_6, %c0_7] : memref<128x128xf32, #tpu.memory_space<vmem>>, vector<128x128xf32>
    %cst_8 = arith.constant dense<0.000000e+00> : vector<128x128xf32>
    %9 = tpu.matmul %7, %8, %cst_8 {dimension_numbers = #tpu.dot_dimension_numbers<[1], [0], [0], [1], [0, 0, 1, 1], [], []>} : vector<128x128xf32>, vector<128x128xf32>, vector<128x128xf32> -> vector<128x128xf32>
    %c0_9 = arith.constant 0 : index
    %c0_10 = arith.constant 0 : index
    %10 = vector.load %arg5[%c0_9, %c0_10] : memref<1x128xf32, #tpu.memory_space<vmem>>, vector<1x128xf32>
    %11 = vector.broadcast %10 : vector<1x128xf32> to vector<128x128xf32>
    %12 = arith.addf %9, %11 : vector<128x128xf32>
    %cst_11 = arith.constant 0.000000e+00 : f32
    %13 = vector.broadcast %cst_11 : f32 to vector<128x128xf32>
    %14 = arith.maximumf %12, %13 : vector<128x128xf32>
    %c0_12 = arith.constant 0 : index
    %c0_13 = arith.constant 0 : index
    %15 = vector.load %arg6[%c0_12, %c0_13] : memref<128x128xf32, #tpu.memory_space<vmem>>, vector<128x128xf32>
    %cst_14 = arith.constant dense<0.000000e+00> : vector<128x128xf32>
    %16 = tpu.matmul %14, %15, %cst_14 {dimension_numbers = #tpu.dot_dimension_numbers<[1], [0], [0], [1], [0, 0, 1, 1], [], []>} : vector<128x128xf32>, vector<128x128xf32>, vector<128x128xf32> -> vector<128x128xf32>
    %c0_15 = arith.constant 0 : index
    %c0_16 = arith.constant 0 : index
    %17 = vector.load %arg7[%c0_15, %c0_16] : memref<1x128xf32, #tpu.memory_space<vmem>>, vector<1x128xf32>
    %18 = vector.broadcast %17 : vector<1x128xf32> to vector<128x128xf32>
    %19 = arith.addf %16, %18 : vector<128x128xf32>
    %20 = tpu.transpose %19, [1, 0] : vector<128x128xf32> -> vector<128x128xf32>
    %21 = vector.extract_strided_slice %20 {offsets = [0, 0], sizes = [8, 128], strides = [1, 1]} : vector<128x128xf32> to vector<8x128xf32>
    %22 = math.tanh %21 : vector<8x128xf32>
    %c0_17 = arith.constant 0 : index
    %c0_18 = arith.constant 0 : index
    %23 = vector.load %arg8[%c0_17, %c0_18] : memref<8x128xf32, #tpu.memory_space<vmem>>, vector<8x128xf32>
    tpu.vector_store %arg8[%c0_17, %c0_18], %22 {strides = array<i32>} : memref<8x128xf32, #tpu.memory_space<vmem>>, vector<8x128xf32>,
    return
  }
  func.func @transform_0(%arg0: i32) -> (i32, i32) {
    %c0_i32 = arith.constant 0 : i32
    %c0_i32_0 = arith.constant 0 : i32
    return %arg0, %c0_i32 : i32, i32
  }
  func.func @transform_1(%arg0: i32) -> (i32, i32) {
    %c0_i32 = arith.constant 0 : i32
    %c0_i32_0 = arith.constant 0 : i32
    %c0_i32_1 = arith.constant 0 : i32
    return %c0_i32, %c0_i32_0 : i32, i32
  }
  func.func @transform_2(%arg0: i32) -> (i32, i32) {
    %c0_i32 = arith.constant 0 : i32
    %c0_i32_0 = arith.constant 0 : i32
    %c0_i32_1 = arith.constant 0 : i32
    return %c0_i32, %c0_i32_0 : i32, i32
  }
  func.func @transform_3(%arg0: i32) -> (i32, i32) {
    %c0_i32 = arith.constant 0 : i32
    %c0_i32_0 = arith.constant 0 : i32
    %c0_i32_1 = arith.constant 0 : i32
    return %c0_i32, %c0_i32_0 : i32, i32
  }
  func.func @transform_4(%arg0: i32) -> (i32, i32) {
    %c0_i32 = arith.constant 0 : i32
    %c0_i32_0 = arith.constant 0 : i32
    %c0_i32_1 = arith.constant 0 : i32
    return %c0_i32, %c0_i32_0 : i32, i32
  }
  func.func @transform_5(%arg0: i32) -> (i32, i32) {
    %c0_i32 = arith.constant 0 : i32
    %c0_i32_0 = arith.constant 0 : i32
    %c0_i32_1 = arith.constant 0 : i32
    return %c0_i32, %c0_i32_0 : i32, i32
  }
  func.func @transform_6(%arg0: i32) -> (i32, i32) {
    %c0_i32 = arith.constant 0 : i32
    %c0_i32_0 = arith.constant 0 : i32
    %c0_i32_1 = arith.constant 0 : i32
    return %c0_i32, %c0_i32_0 : i32, i32
  }
  func.func @transform_7(%arg0: i32) -> (i32, i32) {
    %c0_i32 = arith.constant 0 : i32
    %c0_i32_0 = arith.constant 0 : i32
    return %c0_i32, %arg0 : i32, i32
  }
}

</mosaic_0001>

<llo_original>
// kernel: tpu_custom_call.1
$region0: #{tpu_custom_call.1}
  #allocation0 [shape = 'u32[]', space=smem, size = 0x4, offset = 0x4, fixed_abs, tag = 'smem constant byte address 0x4 - core index']
  #allocation1 [shape = 'u32[72,128]{1,0:T(1,128)}', space=vmem, size = 0x9000, scoped, tag = 'internal scratch']
  %s0 = inlined_call_operand.hbm [shape: f32[4,16], index: 0, kind: input, shape index: {}]
  %s1 = inlined_call_operand.hbm [shape: f32[16,128], index: 1, kind: input, shape index: {}]
  %s2 = inlined_call_operand.vmem [shape: f32[1,128], index: 2, kind: input, shape index: {}]
  %s3 = inlined_call_operand.hbm [shape: f32[128,128], index: 3, kind: input, shape index: {}]
  %s4 = inlined_call_operand.vmem [shape: f32[1,128], index: 4, kind: input, shape index: {}]
  %s5 = inlined_call_operand.hbm [shape: f32[128,128], index: 5, kind: input, shape index: {}]
  %s6 = inlined_call_operand.vmem [shape: f32[1,128], index: 6, kind: input, shape index: {}]
  %s7 = inlined_call_operand.vmem [shape: f32[8,4], index: 7, kind: output, shape index: {}]
  %s8 = sld [smem:[#allocation0]]
  $region54: #{tpu_custom_call.1} parent=0
    _
  %s10 = ssub.s32 1, %s8
  %s11 = scalar_select 0, %s10, %s8
  $region1: #{tpu_custom_call.1} parent=0
    #allocation2 [shape = 'u8[65536]{0}', space=vmem, size = 0x10000, scoped, tag = 'input window, operand 0, single buffered']
    #allocation3 [shape = 's32[1]{0}', space=sflag, size = 0x4, scoped, tag = 'scoped memory for tpu_custom_call.1']
    #allocation4 [shape = 'u8[8192]{0}', space=vmem, size = 0x2000, scoped, tag = 'input window, operand 1, single buffered']
    #allocation5 [shape = 's32[1]{0}', space=sflag, size = 0x4, scoped, tag = 'scoped memory for tpu_custom_call.1']
    #allocation6 [shape = 'u8[65536]{0}', space=vmem, size = 0x10000, scoped, tag = 'input window, operand 3, single buffered']
    #allocation7 [shape = 'u8[65536]{0}', space=vmem, size = 0x10000, scoped, tag = 'input window, operand 5, single buffered']
    #allocation8 [shape = 's32[1]{0}', space=sflag, size = 0x4, scoped, tag = 'scoped memory for tpu_custom_call.1']
    %12 = vsyncpa [#allocation3], 0
    %13 = vsyncpa [#allocation5], 0
    %14 = vsyncpa [#allocation8], 0
    // Predicated region
    $region2: #{tpu_custom_call.1} parent=1 // pred_check
      _
    $region3: #{tpu_custom_call.1} parent=1 // pred_check_branch
      %16 = sbr.rel (0) target = $region5
    $region4: #{tpu_custom_call.1} parent=1 // pred_region
      %18 = vsyncadd [#allocation3], 1984
      %s19 = sshll.u32 %s0, 4
      %s20 = int_to_ptr.hbm [resolvable:$true] %s19
      %s21 = sshll.u32 [#allocation2], 4
      %s22 = int_to_ptr.vmem [resolvable:$true] %s21
      %27 = dma.hbm_to_vmem [thread:$0]  %s20, 64, %s22, [#allocation3], 64, 64, 4
    $region5: #{tpu_custom_call.1} parent=1 // pred_fallthru
      _
    // Predicated region
    $region6: #{tpu_custom_call.1} parent=1 // pred_check
      _
    $region7: #{tpu_custom_call.1} parent=1 // pred_check_branch
      %29 = sbr.rel (0) target = $region9
    $region8: #{tpu_custom_call.1} parent=1 // pred_region
      %31 = vsyncadd [#allocation5], 0
      %s32 = sshll.u32 %s1, 4
      %s33 = int_to_ptr.hbm [resolvable:$true] %s32
      %s34 = sshll.u32 [#allocation4], 4
      %s35 = int_to_ptr.vmem [resolvable:$true] %s34
      %40 = dma.hbm_to_vmem [thread:$0]  %s33, 256, %s35, [#allocation5], 128, 128, 8
    $region9: #{tpu_custom_call.1} parent=1 // pred_fallthru
      _
    // Predicated region
    $region10: #{tpu_custom_call.1} parent=1 // pred_check
      _
    $region11: #{tpu_custom_call.1} parent=1 // pred_check_branch
      %42 = sbr.rel (0) target = $region13
    $region12: #{tpu_custom_call.1} parent=1 // pred_region
      _
    $region13: #{tpu_custom_call.1} parent=1 // pred_fallthru
      _
    // Predicated region
    $region14: #{tpu_custom_call.1} parent=1 // pred_check
      _
    $region15: #{tpu_custom_call.1} parent=1 // pred_check_branch
      %44 = sbr.rel (0) target = $region17
    $region16: #{tpu_custom_call.1} parent=1 // pred_region
      %46 = vsyncadd [#allocation5], 0
      %s47 = sshll.u32 %s3, 4
      %s48 = int_to_ptr.hbm [resolvable:$true] %s47
      %s49 = sshll.u32 [#allocation6], 4
      %s50 = int_to_ptr.vmem [resolvable:$true] %s49
      %55 = dma.hbm_to_vmem [thread:$0]  %s48, 2048, %s50, [#allocation5], 128, 128, 8
    $region17: #{tpu_custom_call.1} parent=1 // pred_fallthru
      _
    // Predicated region
    $region18: #{tpu_custom_call.1} parent=1 // pred_check
      _
    $region19: #{tpu_custom_call.1} parent=1 // pred_check_branch
      %57 = sbr.rel (0) target = $region21
    $region20: #{tpu_custom_call.1} parent=1 // pred_region
      _
    $region21: #{tpu_custom_call.1} parent=1 // pred_fallthru
      _
    // Predicated region
    $region22: #{tpu_custom_call.1} parent=1 // pred_check
      _
    $region23: #{tpu_custom_call.1} parent=1 // pred_check_branch
      %59 = sbr.rel (0) target = $region25
    $region24: #{tpu_custom_call.1} parent=1 // pred_region
      %61 = vsyncadd [#allocation8], 0
      %s62 = sshll.u32 %s5, 4
      %s63 = int_to_ptr.hbm [resolvable:$true] %s62
      %s64 = sshll.u32 [#allocation7], 4
      %s65 = int_to_ptr.vmem [resolvable:$true] %s64
      %70 = dma.hbm_to_vmem [thread:$0]  %s63, 2048, %s65, [#allocation8], 128, 128, 8
    $region25: #{tpu_custom_call.1} parent=1 // pred_fallthru
      _
    // Predicated region
    $region26: #{tpu_custom_call.1} parent=1 // pred_check
      _
    $region27: #{tpu_custom_call.1} parent=1 // pred_check_branch
      %72 = sbr.rel (0) target = $region29
    $region28: #{tpu_custom_call.1} parent=1 // pred_region
      _
    $region29: #{tpu_custom_call.1} parent=1 // pred_fallthru
      _
    // Predicated region
    $region30: #{tpu_custom_call.1} parent=1 // pred_check
      _
    $region31: #{tpu_custom_call.1} parent=1 // pred_check_branch
      %74 = sbr.rel (0) target = $region33
    $region32: #{tpu_custom_call.1} parent=1 // pred_region
      %76 = dma.done [#allocation3], 2048
    $region33: #{tpu_custom_call.1} parent=1 // pred_fallthru
      _
    // Predicated region
    $region34: #{tpu_custom_call.1} parent=1 // pred_check
      _
    $region35: #{tpu_custom_call.1} parent=1 // pred_check_branch
      %78 = sbr.rel (0) target = $region37
    $region36: #{tpu_custom_call.1} parent=1 // pred_region
      %80 = dma.done [#allocation5], 256
    $region37: #{tpu_custom_call.1} parent=1 // pred_fallthru
      _
    // Predicated region
    $region38: #{tpu_custom_call.1} parent=1 // pred_check
      _
    $region39: #{tpu_custom_call.1} parent=1 // pred_check_branch
      %82 = sbr.rel (0) target = $region41
    $region40: #{tpu_custom_call.1} parent=1 // pred_region
      %84 = dma.done [#allocation5], 2048
    $region41: #{tpu_custom_call.1} parent=1 // pred_fallthru
      _
    // Predicated region
    $region42: #{tpu_custom_call.1} parent=1 // pred_check
      _
    $region43: #{tpu_custom_call.1} parent=1 // pred_check_branch
      %86 = sbr.rel (0) target = $region45
    $region44: #{tpu_custom_call.1} parent=1 // pred_region
      %88 = dma.done [#allocation8], 2048
    $region45: #{tpu_custom_call.1} parent=1 // pred_fallthru
      _
    %v89 = vld [vmem:[#allocation2] sm:$0xff]
    %v90 = vld [vmem:[#allocation2 + $0x8] sm:$0xff]
    %v91 = vld [vmem:[#allocation2 + $0x10] sm:$0xff]
    %v92 = vld [vmem:[#allocation2 + $0x18] sm:$0xff]
    %v93 = vld [vmem:[#allocation2 + $0x20] sm:$0xff]
    %v94 = vld [vmem:[#allocation2 + $0x28] sm:$0xff]
    %v95 = vld [vmem:[#allocation2 + $0x30] sm:$0xff]
    %v96 = vld [vmem:[#allocation2 + $0x38] sm:$0xff]
    %v97 = vld [vmem:[#allocation2 + $0x40] sm:$0xff]
    %v98 = vld [vmem:[#allocation2 + $0x48] sm:$0xff]
    %v99 = vld [vmem:[#allocation2 + $0x50] sm:$0xff]
    %v100 = vld [vmem:[#allocation2 + $0x58] sm:$0xff]
    %v101 = vld [vmem:[#allocation2 + $0x60] sm:$0xff]
    %v102 = vld [vmem:[#allocation2 + $0x68] sm:$0xff]
    %v103 = vld [vmem:[#allocation2 + $0x70] sm:$0xff]
    %v104 = vld [vmem:[#allocation2 + $0x78] sm:$0xff]
    %v105 = vld [vmem:[#allocation4] sm:$0xff]
    %v106 = vld [vmem:[#allocation4 + $0x8] sm:$0xff]
    %v107 = vld [vmem:[%s2] sm:$0x1]
    %v109 = vperm.slane %v107, 0
    %vm111 = vcmask 130048
    %v113 = vsel %vm111, %v89, 0
    %v116 = vsel %vm111, %v90, 0
    %v119 = vsel %vm111, %v91, 0
    %v122 = vsel %vm111, %v92, 0
    %v125 = vsel %vm111, %v93, 0
    %v128 = vsel %vm111, %v94, 0
    %v131 = vsel %vm111, %v95, 0
    %v134 = vsel %vm111, %v96, 0
    %v137 = vsel %vm111, %v97, 0
    %v140 = vsel %vm111, %v98, 0
    %v143 = vsel %vm111, %v99, 0
    %v146 = vsel %vm111, %v100, 0
    %v149 = vsel %vm111, %v101, 0
    %v152 = vsel %vm111, %v102, 0
    %v155 = vsel %vm111, %v103, 0
    %v158 = vsel %vm111, %v104, 0
    %160 = vmatpush.msra.mxu0 0.0
    %161 = vmatpush.msra.mxu0 0.0
    %162 = vmatpush.msra.mxu0 0.0
    %163 = vmatpush.msra.mxu0 0.0
    %164 = vmatpush.msra.mxu0 0.0
    %165 = vmatpush.msra.mxu0 0.0
    %166 = vmatpush.msra.mxu0 0.0
    %167 = vmatpush.msra.mxu0 0.0
    %168 = vmatpush.msra.mxu0 0.0
    %169 = vmatpush.msra.mxu0 0.0
    %170 = vmatpush.msra.mxu0 0.0
    %171 = vmatpush.msra.mxu0 0.0
    %172 = vmatpush.msra.mxu0 0.0
    %173 = vmatpush.msra.mxu0 0.0
    %174 = vmatpush.msra.mxu0 %v106
    %175 = vmatpush.msra.mxu0 %v105
    %176 = vmatmul.f32.gmra.mxu0 %v113
    %v177 = vpop.f32.mrf.mxu0
    %v178 = vadd.f32 %v109, %v177
    %179 = vmatmul.f32.gmra.mxu0 %v116
    %v180 = vpop.f32.mrf.mxu0
    %v181 = vadd.f32 %v109, %v180
    %182 = vmatmul.f32.gmra.mxu0 %v119
    %v183 = vpop.f32.mrf.mxu0
    %v184 = vadd.f32 %v109, %v183
    %185 = vmatmul.f32.gmra.mxu0 %v122
    %v186 = vpop.f32.mrf.mxu0
    %v187 = vadd.f32 %v109, %v186
    %188 = vmatmul.f32.gmra.mxu0 %v125
    %v189 = vpop.f32.mrf.mxu0
    %v190 = vadd.f32 %v109, %v189
    %191 = vmatmul.f32.gmra.mxu0 %v128
    %v192 = vpop.f32.mrf.mxu0
    %v193 = vadd.f32 %v109, %v192
    %194 = vmatmul.f32.gmra.mxu0 %v131
    %v195 = vpop.f32.mrf.mxu0
    %v196 = vadd.f32 %v109, %v195
    %197 = vmatmul.f32.gmra.mxu0 %v134
    %v198 = vpop.f32.mrf.mxu0
    %v199 = vadd.f32 %v109, %v198
    %200 = vmatmul.f32.gmra.mxu0 %v137
    %v201 = vpop.f32.mrf.mxu0
    %v202 = vadd.f32 %v109, %v201
    %203 = vmatmul.f32.gmra.mxu0 %v140
    %v204 = vpop.f32.mrf.mxu0
    %v205 = vadd.f32 %v109, %v204
    %206 = vmatmul.f32.gmra.mxu0 %v143
    %v207 = vpop.f32.mrf.mxu0
    %v208 = vadd.f32 %v109, %v207
    %209 = vmatmul.f32.gmra.mxu0 %v146
    %v210 = vpop.f32.mrf.mxu0
    %v211 = vadd.f32 %v109, %v210
    %212 = vmatmul.f32.gmra.mxu0 %v149
    %v213 = vpop.f32.mrf.mxu0
    %v214 = vadd.f32 %v109, %v213
    %215 = vmatmul.f32.gmra.mxu0 %v152
    %v216 = vpop.f32.mrf.mxu0
    %v217 = vadd.f32 %v109, %v216
    %218 = vmatmul.f32.gmra.mxu0 %v155
    %v219 = vpop.f32.mrf.mxu0
    %v220 = vadd.f32 %v109, %v219
    %221 = vmatmul.f32.gmra.mxu0 %v158
    %v222 = vpop.f32.mrf.mxu0
    %v223 = vadd.f32 %v109, %v222
    %224 = vdwg.mxu0
    %v225 = vmax.f32 %v178, 0.0
    %v226 = vmax.f32 %v181, 0.0
    %v227 = vmax.f32 %v184, 0.0
    %v228 = vmax.f32 %v187, 0.0
    %v229 = vmax.f32 %v190, 0.0
    %v230 = vmax.f32 %v193, 0.0
    %v231 = vmax.f32 %v196, 0.0
    %v232 = vmax.f32 %v199, 0.0
    %v233 = vmax.f32 %v202, 0.0
    %v234 = vmax.f32 %v205, 0.0
    %v235 = vmax.f32 %v208, 0.0
    %v236 = vmax.f32 %v211, 0.0
    %v237 = vmax.f32 %v214, 0.0
    %v238 = vmax.f32 %v217, 0.0
    %v239 = vmax.f32 %v220, 0.0
    %v240 = vmax.f32 %v223, 0.0
    %v241 = vld [vmem:[#allocation6] sm:$0xff]
    %v242 = vld [vmem:[#allocation6 + $0x8] sm:$0xff]
    %v243 = vld [vmem:[#allocation6 + $0x10] sm:$0xff]
    %v244 = vld [vmem:[#allocation6 + $0x18] sm:$0xff]
    %v245 = vld [vmem:[#allocation6 + $0x20] sm:$0xff]
    %v246 = vld [vmem:[#allocation6 + $0x28] sm:$0xff]
    %v247 = vld [vmem:[#allocation6 + $0x30] sm:$0xff]
    %v248 = vld [vmem:[#allocation6 + $0x38] sm:$0xff]
    %v249 = vld [vmem:[#allocation6 + $0x40] sm:$0xff]
    %v250 = vld [vmem:[#allocation6 + $0x48] sm:$0xff]
    %v251 = vld [vmem:[#allocation6 + $0x50] sm:$0xff]
    %v252 = vld [vmem:[#allocation6 + $0x58] sm:$0xff]
    %v253 = vld [vmem:[#allocation6 + $0x60] sm:$0xff]
    %v254 = vld [vmem:[#allocation6 + $0x68] sm:$0xff]
    %v255 = vld [vmem:[#allocation6 + $0x70] sm:$0xff]
    %v256 = vld [vmem:[#allocation6 + $0x78] sm:$0xff]
    %v257 = vld [vmem:[%s4] sm:$0x1]
    %v259 = vperm.slane %v257, 0
    %261 = vmatpush.msra.mxu0 %v256
    %262 = vmatpush.msra.mxu0 %v255
    %263 = vmatpush.msra.mxu0 %v254
    %264 = vmatpush.msra.mxu0 %v253
    %265 = vmatpush.msra.mxu0 %v252
    %266 = vmatpush.msra.mxu0 %v251
    %267 = vmatpush.msra.mxu0 %v250
    %268 = vmatpush.msra.mxu0 %v249
    %269 = vmatpush.msra.mxu0 %v248
    %270 = vmatpush.msra.mxu0 %v247
    %271 = vmatpush.msra.mxu0 %v246
    %272 = vmatpush.msra.mxu0 %v245
    %273 = vmatpush.msra.mxu0 %v244
    %274 = vmatpush.msra.mxu0 %v243
    %275 = vmatpush.msra.mxu0 %v242
    %276 = vmatpush.msra.mxu0 %v241
    %277 = vmatmul.f32.gmra.mxu0 %v225
    %v278 = vpop.f32.mrf.mxu0
    %v279 = vadd.f32 %v259, %v278
    %280 = vmatmul.f32.gmra.mxu0 %v226
    %v281 = vpop.f32.mrf.mxu0
    %v282 = vadd.f32 %v259, %v281
    %283 = vmatmul.f32.gmra.mxu0 %v227
    %v284 = vpop.f32.mrf.mxu0
    %v285 = vadd.f32 %v259, %v284
    %286 = vmatmul.f32.gmra.mxu0 %v228
    %v287 = vpop.f32.mrf.mxu0
    %v288 = vadd.f32 %v259, %v287
    %289 = vmatmul.f32.gmra.mxu0 %v229
    %v290 = vpop.f32.mrf.mxu0
    %v291 = vadd.f32 %v259, %v290
    %292 = vmatmul.f32.gmra.mxu0 %v230
    %v293 = vpop.f32.mrf.mxu0
    %v294 = vadd.f32 %v259, %v293
    %295 = vmatmul.f32.gmra.mxu0 %v231
    %v296 = vpop.f32.mrf.mxu0
    %v297 = vadd.f32 %v259, %v296
    %298 = vmatmul.f32.gmra.mxu0 %v232
    %v299 = vpop.f32.mrf.mxu0
    %v300 = vadd.f32 %v259, %v299
    %301 = vmatmul.f32.gmra.mxu0 %v233
    %v302 = vpop.f32.mrf.mxu0
    %v303 = vadd.f32 %v259, %v302
    %304 = vmatmul.f32.gmra.mxu0 %v234
    %v305 = vpop.f32.mrf.mxu0
    %v306 = vadd.f32 %v259, %v305
    %307 = vmatmul.f32.gmra.mxu0 %v235
    %v308 = vpop.f32.mrf.mxu0
    %v309 = vadd.f32 %v259, %v308
    %310 = vmatmul.f32.gmra.mxu0 %v236
    %v311 = vpop.f32.mrf.mxu0
    %v312 = vadd.f32 %v259, %v311
    %313 = vmatmul.f32.gmra.mxu0 %v237
    %v314 = vpop.f32.mrf.mxu0
    %v315 = vadd.f32 %v259, %v314
    %316 = vmatmul.f32.gmra.mxu0 %v238
    %v317 = vpop.f32.mrf.mxu0
    %v318 = vadd.f32 %v259, %v317
    %319 = vmatmul.f32.gmra.mxu0 %v239
    %v320 = vpop.f32.mrf.mxu0
    %v321 = vadd.f32 %v259, %v320
    %322 = vmatmul.f32.gmra.mxu0 %v240
    %v323 = vpop.f32.mrf.mxu0
    %v324 = vadd.f32 %v259, %v323
    %325 = vdwg.mxu0
    %v326 = vmax.f32 %v279, 0.0
    %v327 = vmax.f32 %v282, 0.0
    %v328 = vmax.f32 %v285, 0.0
    %v329 = vmax.f32 %v288, 0.0
    %v330 = vmax.f32 %v291, 0.0
    %v331 = vmax.f32 %v294, 0.0
    %v332 = vmax.f32 %v297, 0.0
    %v333 = vmax.f32 %v300, 0.0
    %v334 = vmax.f32 %v303, 0.0
    %v335 = vmax.f32 %v306, 0.0
    %v336 = vmax.f32 %v309, 0.0
    %v337 = vmax.f32 %v312, 0.0
    %v338 = vmax.f32 %v315, 0.0
    %v339 = vmax.f32 %v318, 0.0
    %v340 = vmax.f32 %v321, 0.0
    %v341 = vmax.f32 %v324, 0.0
    %v342 = vld [vmem:[#allocation7] sm:$0xff]
    %v343 = vld [vmem:[#allocation7 + $0x8] sm:$0xff]
    %v344 = vld [vmem:[#allocation7 + $0x10] sm:$0xff]
    %v345 = vld [vmem:[#allocation7 + $0x18] sm:$0xff]
    %v346 = vld [vmem:[#allocation7 + $0x20] sm:$0xff]
    %v347 = vld [vmem:[#allocation7 + $0x28] sm:$0xff]
    %v348 = vld [vmem:[#allocation7 + $0x30] sm:$0xff]
    %v349 = vld [vmem:[#allocation7 + $0x38] sm:$0xff]
    %v350 = vld [vmem:[#allocation7 + $0x40] sm:$0xff]
    %v351 = vld [vmem:[#allocation7 + $0x48] sm:$0xff]
    %v352 = vld [vmem:[#allocation7 + $0x50] sm:$0xff]
    %v353 = vld [vmem:[#allocation7 + $0x58] sm:$0xff]
    %v354 = vld [vmem:[#allocation7 + $0x60] sm:$0xff]
    %v355 = vld [vmem:[#allocation7 + $0x68] sm:$0xff]
    %v356 = vld [vmem:[#allocation7 + $0x70] sm:$0xff]
    %v357 = vld [vmem:[#allocation7 + $0x78] sm:$0xff]
    %v358 = vld [vmem:[%s6] sm:$0x1]
    %v360 = vperm.slane %v358, 0
    %362 = vmatpush.msra.mxu0 %v357
    %363 = vmatpush.msra.mxu0 %v356
    %364 = vmatpush.msra.mxu0 %v355
    %365 = vmatpush.msra.mxu0 %v354
    %366 = vmatpush.msra.mxu0 %v353
    %367 = vmatpush.msra.mxu0 %v352
    %368 = vmatpush.msra.mxu0 %v351
    %369 = vmatpush.msra.mxu0 %v350
    %370 = vmatpush.msra.mxu0 %v349
    %371 = vmatpush.msra.mxu0 %v348
    %372 = vmatpush.msra.mxu0 %v347
    %373 = vmatpush.msra.mxu0 %v346
    %374 = vmatpush.msra.mxu0 %v345
    %375 = vmatpush.msra.mxu0 %v344
    %376 = vmatpush.msra.mxu0 %v343
    %377 = vmatpush.msra.mxu0 %v342
    %378 = vmatmul.f32.gmra.mxu0 %v326
    %v379 = vpop.f32.mrf.mxu0
    %v380 = vadd.f32 %v360, %v379
    %381 = vmatmul.f32.gmra.mxu0 %v327
    %v382 = vpop.f32.mrf.mxu0
    %v383 = vadd.f32 %v360, %v382
    %384 = vmatmul.f32.gmra.mxu0 %v328
    %v385 = vpop.f32.mrf.mxu0
    %v386 = vadd.f32 %v360, %v385
    %387 = vmatmul.f32.gmra.mxu0 %v329
    %v388 = vpop.f32.mrf.mxu0
    %v389 = vadd.f32 %v360, %v388
    %390 = vmatmul.f32.gmra.mxu0 %v330
    %v391 = vpop.f32.mrf.mxu0
    %v392 = vadd.f32 %v360, %v391
    %393 = vmatmul.f32.gmra.mxu0 %v331
    %v394 = vpop.f32.mrf.mxu0
    %v395 = vadd.f32 %v360, %v394
    %396 = vmatmul.f32.gmra.mxu0 %v332
    %v397 = vpop.f32.mrf.mxu0
    %v398 = vadd.f32 %v360, %v397
    %399 = vmatmul.f32.gmra.mxu0 %v333
    %v400 = vpop.f32.mrf.mxu0
    %v401 = vadd.f32 %v360, %v400
    %402 = vmatmul.f32.gmra.mxu0 %v334
    %v403 = vpop.f32.mrf.mxu0
    %v404 = vadd.f32 %v360, %v403
    %405 = vmatmul.f32.gmra.mxu0 %v335
    %v406 = vpop.f32.mrf.mxu0
    %v407 = vadd.f32 %v360, %v406
    %408 = vmatmul.f32.gmra.mxu0 %v336
    %v409 = vpop.f32.mrf.mxu0
    %v410 = vadd.f32 %v360, %v409
    %411 = vmatmul.f32.gmra.mxu0 %v337
    %v412 = vpop.f32.mrf.mxu0
    %v413 = vadd.f32 %v360, %v412
    %414 = vmatmul.f32.gmra.mxu0 %v338
    %v415 = vpop.f32.mrf.mxu0
    %v416 = vadd.f32 %v360, %v415
    %417 = vmatmul.f32.gmra.mxu0 %v339
    %v418 = vpop.f32.mrf.mxu0
    %v419 = vadd.f32 %v360, %v418
    %420 = vmatmul.f32.gmra.mxu0 %v340
    %v421 = vpop.f32.mrf.mxu0
    %v422 = vadd.f32 %v360, %v421
    %423 = vmatmul.f32.gmra.mxu0 %v341
    %v424 = vpop.f32.mrf.mxu0
    %v425 = vadd.f32 %v360, %v424
    %426 = vdwg.mxu0
    %427 = vxpose.xlu0.b32.start [1/16] %v380, 128
    %428 = vxpose.xlu0.b32.cont [2/16] %v383, 128
    %429 = vxpose.xlu0.b32.cont [3/16] %v386, 128
    %430 = vxpose.xlu0.b32.cont [4/16] %v389, 128
    %431 = vxpose.xlu0.b32.cont [5/16] %v392, 128
    %432 = vxpose.xlu0.b32.cont [6/16] %v395, 128
    %433 = vxpose.xlu0.b32.cont [7/16] %v398, 128
    %434 = vxpose.xlu0.b32.cont [8/16] %v401, 128
    %435 = vxpose.xlu0.b32.cont [9/16] %v404, 128
    %436 = vxpose.xlu0.b32.cont [10/16] %v407, 128
    %437 = vxpose.xlu0.b32.cont [11/16] %v410, 128
    %438 = vxpose.xlu0.b32.cont [12/16] %v413, 128
    %439 = vxpose.xlu0.b32.cont [13/16] %v416, 128
    %440 = vxpose.xlu0.b32.cont [14/16] %v419, 128
    %441 = vxpose.xlu0.b32.cont [15/16] %v422, 128
    %442 = vxpose.xlu0.b32.end [16/16] %v425, 128
    %v443 = vpop.trf.xlu0
    %v444 = vpop.trf.xlu0
    %v445 = vpop.trf.xlu0
    %v446 = vpop.trf.xlu0
    %v447 = vpop.trf.xlu0
    %v448 = vpop.trf.xlu0
    %v449 = vpop.trf.xlu0
    %v450 = vpop.trf.xlu0
    %v451 = vpop.trf.xlu0
    %v452 = vpop.trf.xlu0
    %v453 = vpop.trf.xlu0
    %v454 = vpop.trf.xlu0
    %v455 = vpop.trf.xlu0
    %v456 = vpop.trf.xlu0
    %v457 = vpop.trf.xlu0
    %v458 = vpop.trf.xlu0
    %v459 = vtanh.pop %v443
    %460 = vst [vmem:[%s7] sm:$0xff] %v459
    // Predicated region
    $region46: #{tpu_custom_call.1} parent=1 // pred_check
      _
    $region47: #{tpu_custom_call.1} parent=1 // pred_check_branch
      %462 = sbr.rel (0) target = $region49
    $region48: #{tpu_custom_call.1} parent=1 // pred_region
      _
    $region49: #{tpu_custom_call.1} parent=1 // pred_fallthru
      _
    // Predicated region
    $region50: #{tpu_custom_call.1} parent=1 // pred_check
      _
    $region51: #{tpu_custom_call.1} parent=1 // pred_check_branch
      %464 = sbr.rel (0) target = $region53
    $region52: #{tpu_custom_call.1} parent=1 // pred_region
      _
    $region53: #{tpu_custom_call.1} parent=1 // pred_fallthru
      _
    %465 = vsyncpa [#allocation3], 1
    %466 = vsyncpa [#allocation5], 1
    %467 = vsyncpa [#allocation8], 1

</llo_original>
